<compile_context>
chip_gen: v7x
topology: tpu7x:2x2x1
jax: 0.10.0
libtpu: 0.0.40
codegen_flags: <defaults>
</compile_context>

<pallas_src>
import jax
import jax.numpy as jnp
from jax.experimental import pallas as pl
from jax.experimental.pallas import tpu as pltpu

LANE = 128


def _round_up(v, m):
    return (v + m - 1) // m * m


def _cdiv(a, b):
    return (a + b - 1) // b


def _control_channel_kernel(a_ref, x_ref, o_ref):
    # a_ref: (row_tile, 1)        gate block for this grid step (gate dtype)
    # x_ref: (row_tile, hw_tile)  input block, original dtype (no wrapper cast)
    # o_ref: (row_tile, hw_tile)  output block, promoted dtype, lane-dense
    # Promotion to the output dtype happens here (VPU broadcast-multiply).
    o_ref[...] = (a_ref[...] * x_ref[...]).astype(o_ref.dtype)


def _sublane_multiple(dtype):
    # f32 -> 8, bf16 -> 16, int8 -> 32 (sub-32-bit dtypes pack along sublanes)
    return max(8, 32 // jnp.dtype(dtype).itemsize)


def control_channel(x, a, *, min_pallas_bytes=1 << 20):
    """Pallas implementation of ControlChannel.forward: a.expand_as(x) * x.

    x : (N, C, H, W) input tensor
    a : (N, C, 1, 1) gate tensor (the selected entry of `outputs`)
    """
    N, C, H, W = x.shape
    assert a.shape == (N, C, 1, 1), "gate must broadcast over spatial dims only"

    out_dtype = jnp.result_type(x.dtype, a.dtype)   # PyTorch-style promotion
    x_item = jnp.dtype(x.dtype).itemsize
    a_item = jnp.dtype(a.dtype).itemsize
    o_item = jnp.dtype(out_dtype).itemsize
    bytes_pe = x_item + o_item                       # HBM traffic per element

    NC, HW = N * C, H * W

    # ---- tiny-tensor fallback: fused XLA elementwise beats kernel launch cost
    if NC * HW * bytes_pe < min_pallas_bytes:
        return (a * x).astype(out_dtype)

    # ---- generation-aware budgets --------------------------------------------
    try:
        vmem_cap = pltpu.get_tpu_info().vmem_capacity_bytes
    except Exception:
        vmem_cap = 64 * 1024 * 1024                  # conservative (v7x)
    if vmem_cap >= 100 * 1024 * 1024:                # v5e / v6e (128 MiB VMEM)
        target_tile_bytes = 12 * 1024 * 1024
        vmem_budget_cap = 96 * 1024 * 1024
    else:                                            # v7x (64 MiB VMEM)
        target_tile_bytes = 6 * 1024 * 1024
        vmem_budget_cap = 48 * 1024 * 1024

    # Sublane alignment must satisfy the narrowest dtype touched by any block.
    sub = max(_sublane_multiple(x.dtype),
              _sublane_multiple(a.dtype),
              _sublane_multiple(out_dtype))

    # ---- HW tiling (lane axis): no padding passes ----------------------------
    if HW * sub * bytes_pe <= target_tile_bytes:
        hw_tile = HW                                 # full-extent last dim
    else:
        max_hw = max(LANE, (target_tile_bytes // (bytes_pe * sub)) // LANE * LANE)
        if HW % LANE == 0:
            # Largest 128-multiple divisor of HW that fits -> zero padded traffic.
            n128 = HW // LANE
            best = LANE
            d = 1
            while d * d <= n128:
                if n128 % d == 0:
                    for q in (d, n128 // d):
                        cand = q * LANE
                        if best < cand <= max_hw:
                            best = cand
                d += 1
            hw_tile = best
        else:
            hw_tile = max_hw                         # ragged tail -> masked stores
    n_hw = _cdiv(HW, hw_tile)

    # ---- row tiling (sublane axis): grow toward the target tile size ---------
    if NC <= sub:
        row_tile = NC                                # full-extent (always legal)
    else:
        rows_target = max(sub, target_tile_bytes // (hw_tile * bytes_pe))
        row_tile = max(sub, (rows_target // sub) * sub)
        row_tile = min(row_tile, _round_up(NC, sub))
    n_row = _cdiv(NC, row_tile)

    # v7x megacore balance: prefer an even total step count when cheap to get.
    if (n_row * n_hw) % 2 == 1 and NC >= 2 * sub:
        row_tile = max(sub, _round_up(_cdiv(NC, n_row + 1), sub))
        n_row = _cdiv(NC, row_tile)

    # ---- VMEM limit: double-buffered x/out tiles + (8,128)-padded gate tile --
    tile_bytes = row_tile * hw_tile * bytes_pe
    gate_tile_bytes = _round_up(max(row_tile, 1), 8) * LANE * a_item
    need = 2 * (tile_bytes + gate_tile_bytes) + (2 << 20)
    vmem_limit = int(min(vmem_budget_cap, max(need, 32 * 1024 * 1024)))

    x2 = x.reshape(NC, HW)                           # views, no HBM copies
    a2 = a.reshape(NC, 1)

    cost = pl.CostEstimate(
        flops=NC * HW,
        transcendentals=0,
        bytes_accessed=NC * HW * bytes_pe + NC * a_item,
    )

    out2 = pl.pallas_call(
        _control_channel_kernel,
        out_shape=jax.ShapeDtypeStruct((NC, HW), out_dtype),
        grid_spec=pltpu.PrefetchScalarGridSpec(
            num_scalar_prefetch=0,
            grid=(n_row, n_hw),
            in_specs=[
                # Per-step gate block: tiny pipelined DMA, hidden under the x DMA.
                pl.BlockSpec((row_tile, 1), lambda i, j: (i, 0)),
                # Lane-dense input slab in its ORIGINAL dtype (cast in-kernel).
                pl.BlockSpec((row_tile, hw_tile), lambda i, j: (i, j)),
            ],
            out_specs=pl.BlockSpec((row_tile, hw_tile), lambda i, j: (i, j)),
        ),
        compiler_params=pltpu.CompilerParams(
            dimension_semantics=("parallel", "parallel"),
            vmem_limit_bytes=vmem_limit,
        ),
        cost_estimate=cost,
    )(a2, x2)

    return out2.reshape(N, C, H, W)


def control_channel_ref(x, a):
    # Pure-JAX reference of `a.expand_as(x) * x`
    return jnp.broadcast_to(a, x.shape).astype(jnp.result_type(x.dtype, a.dtype)) * x


if __name__ == "__main__":
    key = jax.random.PRNGKey(0)
    kx, ka, kx2, ka2 = jax.random.split(key, 4)

    # `outputs` is the list of prior-layer outputs; ControlChannel(layers=[0])
    # picks outputs[0] as the gate.
    layers = [0]

    # --- Test 1: small aligned shape, f32, force the Pallas path -------------
    N, C, H, W = 2, 4, 16, 16
    x = jax.random.normal(kx, (N, C, H, W), dtype=jnp.float32)
    outputs = [jax.random.normal(ka, (N, C, 1, 1), dtype=jnp.float32)]
    a = outputs[layers[0]]

    out = jax.block_until_ready(control_channel(x, a, min_pallas_bytes=0))
    ref = control_channel_ref(x, a)
    assert out.shape == ref.shape and out.dtype == ref.dtype
    assert jnp.allclose(out, ref, atol=1e-6, rtol=1e-6), "mismatch vs reference (aligned)"

    # --- Test 2: non-tile-aligned shape + mixed dtype (bf16 x, f32 gate) -----
    # Exercises boundary handling (NC=6, HW=196) and in-kernel type promotion.
    N2, C2, H2, W2 = 2, 3, 14, 14
    xb = jax.random.normal(kx2, (N2, C2, H2, W2), dtype=jnp.bfloat16)
    gb = jax.random.normal(ka2, (N2, C2, 1, 1), dtype=jnp.float32)
    out2 = jax.block_until_ready(control_channel(xb, gb, min_pallas_bytes=0))
    ref2 = control_channel_ref(xb, gb)
    assert out2.shape == ref2.shape and out2.dtype == ref2.dtype
    assert jnp.allclose(out2, ref2, atol=1e-5, rtol=1e-5), "mismatch vs reference (ragged)"

    print("KERNEL_OK")
</pallas_src>

<mosaic_0001>
module attributes {stable_mosaic.version = 11 : i64} {
  func.func @_control_channel_kernel(%arg0: i32, %arg1: i32, %arg2: memref<8x1xf32, #tpu.memory_space<vmem>>, %arg3: memref<8x256xf32, #tpu.memory_space<vmem>>, %arg4: memref<8x256xf32, #tpu.memory_space<vmem>>) attributes {dimension_semantics = [#tpu.dimension_semantics<parallel>, #tpu.dimension_semantics<parallel>], iteration_bounds = array<i64: 1, 1>, scalar_prefetch = 0 : i64, scratch_operands = 0 : i64, tpu.core_type = #tpu.core_type<tc>, window_params = [{transform_indices = @transform_0, window_bounds = array<i64: 8, 1>}, {transform_indices = @transform_1, window_bounds = array<i64: 8, 256>}, {transform_indices = @transform_2, window_bounds = array<i64: 8, 256>}]} {
    %c0 = arith.constant 0 : index
    %c0_0 = arith.constant 0 : index
    %0 = vector.load %arg2[%c0, %c0_0] : memref<8x1xf32, #tpu.memory_space<vmem>>, vector<8x1xf32>
    %c0_1 = arith.constant 0 : index
    %c0_2 = arith.constant 0 : index
    %1 = vector.load %arg3[%c0_1, %c0_2] : memref<8x256xf32, #tpu.memory_space<vmem>>, vector<8x256xf32>
    %2 = vector.broadcast %0 : vector<8x1xf32> to vector<8x256xf32>
    %3 = arith.mulf %2, %1 : vector<8x256xf32>
    %c0_3 = arith.constant 0 : index
    %c0_4 = arith.constant 0 : index
    %4 = vector.load %arg4[%c0_3, %c0_4] : memref<8x256xf32, #tpu.memory_space<vmem>>, vector<8x256xf32>
    tpu.vector_store %arg4[%c0_3, %c0_4], %3 {strides = array<i32>} : memref<8x256xf32, #tpu.memory_space<vmem>>, vector<8x256xf32>,
    return
  }
  func.func @transform_0(%arg0: i32, %arg1: i32) -> (i32, i32) {
    %c0_i32 = arith.constant 0 : i32
    %c0_i32_0 = arith.constant 0 : i32
    return %arg0, %c0_i32 : i32, i32
  }
  func.func @transform_1(%arg0: i32, %arg1: i32) -> (i32, i32) {
    %c0_i32 = arith.constant 0 : i32
    return %arg0, %arg1 : i32, i32
  }
  func.func @transform_2(%arg0: i32, %arg1: i32) -> (i32, i32) {
    %c0_i32 = arith.constant 0 : i32
    return %arg0, %arg1 : i32, i32
  }
}

</mosaic_0001>

<llo_original>
// kernel: tpu_custom_call.1
$region0: #{tpu_custom_call.1}
  #allocation0 [shape = 'u32[]', space=smem, size = 0x4, offset = 0x4, fixed_abs, tag = 'smem constant byte address 0x4 - core index']
  #allocation1 [shape = 'u32[144,128]{1,0:T(1,128)}', space=vmem, size = 0x12000, scoped, tag = 'internal scratch']
  %s0 = inlined_call_operand.vmem [shape: f32[8,1], index: 0, kind: input, shape index: {}]
  %s1 = inlined_call_operand.hbm [shape: f32[8,256], index: 1, kind: input, shape index: {}]
  %s2 = inlined_call_operand.hbm [shape: f32[8,256], index: 2, kind: output, shape index: {}]
  %s3 = sld [smem:[#allocation0]]
  $region22: #{tpu_custom_call.1} parent=0
    _
  %s5 = ssub.s32 1, %s3
  %s6 = scalar_select 0, %s5, %s3
  $region1: #{tpu_custom_call.1} parent=0
    #allocation2 [shape = 'u8[8192]{0}', space=vmem, size = 0x2000, scoped, tag = 'input window, operand 1, single buffered']
    #allocation3 [shape = 's32[1]{0}', space=sflag, size = 0x4, scoped, tag = 'scoped memory for tpu_custom_call.1']
    #allocation4 [shape = 's32[1]{0}', space=sflag, size = 0x4, scoped, tag = 'scoped memory for tpu_custom_call.1']
    #allocation5 [shape = 'u8[8192]{0}', space=vmem, size = 0x2000, scoped, tag = 'output window, operand 0, single buffered']
    %7 = vsyncpa [#allocation3], 0
    %8 = vsyncpa [#allocation4], 0
    // Predicated region
    $region2: #{tpu_custom_call.1} parent=1 // pred_check
      _
    $region3: #{tpu_custom_call.1} parent=1 // pred_check_branch
      %10 = sbr.rel (0) target = $region5
    $region4: #{tpu_custom_call.1} parent=1 // pred_region
      _
    $region5: #{tpu_custom_call.1} parent=1 // pred_fallthru
      _
    // Predicated region
    $region6: #{tpu_custom_call.1} parent=1 // pred_check
      _
    $region7: #{tpu_custom_call.1} parent=1 // pred_check_branch
      %12 = sbr.rel (0) target = $region9
    $region8: #{tpu_custom_call.1} parent=1 // pred_region
      %s14 = ssub.s32 256, 256
      %15 = vsyncadd [#allocation3], %s14
      %s17 = sshll.u32 [#allocation2], 4
      %s18 = int_to_ptr.vmem [resolvable:$true] %s17
      %20 = dma.hbm_to_vmem [thread:$0]  %s1, 256, %s18, [#allocation3]
    $region9: #{tpu_custom_call.1} parent=1 // pred_fallthru
      _
    // Predicated region
    $region10: #{tpu_custom_call.1} parent=1 // pred_check
      _
    $region11: #{tpu_custom_call.1} parent=1 // pred_check_branch
      %22 = sbr.rel (0) target = $region13
    $region12: #{tpu_custom_call.1} parent=1 // pred_region
      %23 = dma.done [#allocation3], 256
    $region13: #{tpu_custom_call.1} parent=1 // pred_fallthru
      _
    %v24 = vld [vmem:[%s0] sm:$0xff]
    %v25 = vld [vmem:[#allocation2] sm:$0xff]
    %v26 = vld [vmem:[#allocation2 + $0x8] sm:$0xff]
    %28 = vset.pattern.permute.xlu0 0
    %29 = vperm.xlu0 %28, %v24
    %v30 = vpop.permute.xlu0 %29
    %v32 = vmul.f32 %v30, %v25
    %v33 = vmul.f32 %v30, %v26
    %34 = vst [vmem:[#allocation5] sm:$0xff] %v32
    %35 = vst [vmem:[#allocation5 + $0x8] sm:$0xff] %v33
    // Predicated region
    $region14: #{tpu_custom_call.1} parent=1 // pred_check
      _
    $region15: #{tpu_custom_call.1} parent=1 // pred_check_branch
      %37 = sbr.rel (0) target = $region17
    $region16: #{tpu_custom_call.1} parent=1 // pred_region
      %s39 = ssub.s32 256, 256
      %40 = vsyncadd [#allocation4], %s39
      %s42 = sshll.u32 [#allocation5], 4
      %s43 = int_to_ptr.vmem [resolvable:$true] %s42
      %45 = dma.vmem_to_hbm [thread:$0]  %s43, 256, %s2, [#allocation4]
    $region17: #{tpu_custom_call.1} parent=1 // pred_fallthru
      _
    // Predicated region
    $region18: #{tpu_custom_call.1} parent=1 // pred_check
      _
    $region19: #{tpu_custom_call.1} parent=1 // pred_check_branch
      %47 = sbr.rel (0) target = $region21
    $region20: #{tpu_custom_call.1} parent=1 // pred_region
      %48 = dma.done [#allocation4], 256
    $region21: #{tpu_custom_call.1} parent=1 // pred_fallthru
      _
    %49 = vsyncpa [#allocation3], 1
    %50 = vsyncpa [#allocation4], 1

</llo_original>
